<compile_context>
chip_gen: v7x
topology: tpu7x:2x2x1
jax: 0.10.0
libtpu: 0.0.40
codegen_flags: <defaults>
</compile_context>

<pallas_src>
import jax
import jax.numpy as jnp
from jax.experimental import pallas as pl
from jax.experimental.pallas import tpu as pltpu


# ----------------------------------------------------------------------------
# Pallas kernel: full 3-layer dual-graph GCN + fc head, all batches fused.
# ----------------------------------------------------------------------------
def mvgcn_kernel(
    fcb_ref,        # SMEM (1, 1)        fc bias (scalar)
    x_ref,          # VMEM (BN, 1)       batch-major flattened input
    lcat_ref,       # VMEM (2BN, BN)     [kron(I_B,L_topo); kron(I_B,L_sim)]
    w14_ref,        # VMEM (2, H1)       [w0*W1[0,:]; w1*W4[0,:]]   (input_dim==1)
    w2c_ref,        # VMEM (2*H1, H2)    [w0*W2; w1*W5]
    w3c_ref,        # VMEM (2*H2, H3)    [w0*W3; w1*W6]
    b1_ref,         # VMEM (BN, H1)      tile(w0*b1 + w1*b4)
    b2_ref,         # VMEM (BN, H2)      tile(w0*b2 + w1*b5)
    b3_ref,         # VMEM (BN, H3)      tile(w0*b3 + w1*b6)
    fcw_ref,        # VMEM (1, H3)       fc weight as a row
    out_ref,        # VMEM (1, BN)       lane-dense output row
):
    bn = x_ref.shape[0]
    lcat = lcat_ref[...]                                   # (2BN, BN)

    # ---- layer 1: node mix on MXU, 1->H1 expansion as VPU outer product ----
    xm = jnp.dot(lcat, x_ref[...],
                 preferred_element_type=jnp.float32)       # (2BN, 1)
    w14 = w14_ref[...]                                     # (2, H1)
    h = jnp.maximum(
        xm[:bn] * w14[0:1, :] + xm[bn:] * w14[1:2, :] + b1_ref[...], 0.0)

    # ---- layers 2 & 3: fused dual-graph node mix + pre-scaled feature mix ----
    def dual_layer(p, wc_ref, b_ref):
        hin = p.shape[1]
        ts = jnp.dot(lcat, p,
                     preferred_element_type=jnp.float32)   # (2BN, Hin): [L_t@P; L_s@P]
        wc = wc_ref[...]                                   # (2*Hin, Hout)
        z = (jnp.dot(ts[:bn], wc[:hin], preferred_element_type=jnp.float32)
             + jnp.dot(ts[bn:], wc[hin:], preferred_element_type=jnp.float32)
             + b_ref[...])
        return jnp.maximum(z, 0.0)                         # (BN, Hout)

    h = dual_layer(h, w2c_ref, b2_ref)                     # (BN, H2)
    h = dual_layer(h, w3c_ref, b3_ref)                     # (BN, H3)

    # ---- fc head: one transposed matmul -> lane-dense (1, BN) output ----
    y = jax.lax.dot_general(
        fcw_ref[...], h, (((1,), (1,)), ((), ())),
        preferred_element_type=jnp.float32)                # (1, BN)
    out_ref[...] = y + fcb_ref[0, 0]


# ----------------------------------------------------------------------------
# Wrapper: parameter fusion / layout prep in plain JAX, one pallas_call.
# ----------------------------------------------------------------------------
@jax.jit
def mvgcn_forward(x, params):
    """x: (B, N) float32 -> (B, N) float32."""
    bsz, n = x.shape
    bn = bsz * n
    f32 = jnp.float32
    assert params["w1"].shape[0] == 1, "kernel assumes input_dim == 1"

    w = jax.nn.softmax(params["graph_weight"].astype(f32))
    w0, w1 = w[0], w[1]

    # Block-diagonal batched Laplacians, stacked: (2BN, BN).
    eye_b = jnp.eye(bsz, dtype=f32)
    lcat = jnp.concatenate(
        [jnp.kron(eye_b, params["topo_L"].astype(f32)),
         jnp.kron(eye_b, params["sim_L"].astype(f32))], axis=0)

    # Softmax graph weights folded into the GCN weights / biases.
    w14 = jnp.stack([w0 * params["w1"][0], w1 * params["w4"][0]], axis=0)   # (2, H1)
    w2c = jnp.concatenate([w0 * params["w2"], w1 * params["w5"]], axis=0)   # (2H1, H2)
    w3c = jnp.concatenate([w0 * params["w3"], w1 * params["w6"]], axis=0)   # (2H2, H3)
    b1f = jnp.tile(w0 * params["b1"] + w1 * params["b4"], (bsz, 1))         # (BN, H1)
    b2f = jnp.tile(w0 * params["b2"] + w1 * params["b5"], (bsz, 1))         # (BN, H2)
    b3f = jnp.tile(w0 * params["b3"] + w1 * params["b6"], (bsz, 1))         # (BN, H3)

    xf = x.astype(f32).reshape(bn, 1)                                       # batch-major
    fcw = params["fc_w"].astype(f32).reshape(1, -1)                         # (1, H3)
    fcb = params["fc_b"].astype(f32).reshape(1, 1)

    vmem = pl.BlockSpec(memory_space=pltpu.MemorySpace.VMEM)
    smem = pl.BlockSpec(memory_space=pltpu.MemorySpace.SMEM)

    y = pl.pallas_call(
        mvgcn_kernel,
        out_shape=jax.ShapeDtypeStruct((1, bn), f32),
        in_specs=[smem] + [vmem] * 9,
        out_specs=vmem,
    )(fcb, xf, lcat, w14, w2c, w3c, b1f, b2f, b3f, fcw)
    return y.reshape(bsz, n)


# ----------------------------------------------------------------------------
# Pure-JAX reference (mirrors the PyTorch forward exactly)
# ----------------------------------------------------------------------------
def mvgcn_reference(x, params):
    w = jax.nn.softmax(params["graph_weight"])
    X = x[:, :, None]

    def gconv(X, W, bias, L):
        h = jnp.einsum("nm,bmd->bnd", L, X)
        return jnp.einsum("bnd,de->bne", h, W) + bias[None]

    p1 = jax.nn.relu(w[0] * gconv(X, params["w1"], params["b1"], params["topo_L"])
                     + w[1] * gconv(X, params["w4"], params["b4"], params["sim_L"]))
    p2 = jax.nn.relu(w[0] * gconv(p1, params["w2"], params["b2"], params["topo_L"])
                     + w[1] * gconv(p1, params["w5"], params["b5"], params["sim_L"]))
    p3 = jax.nn.relu(w[0] * gconv(p2, params["w3"], params["b3"], params["topo_L"])
                     + w[1] * gconv(p2, params["w6"], params["b6"], params["sim_L"]))
    pre = jnp.einsum("bnd,de->bne", p3, params["fc_w"]) + params["fc_b"]
    return pre[:, :, 0]


# ----------------------------------------------------------------------------
# Parameter / input construction (deterministic, synthetic)
# ----------------------------------------------------------------------------
def calculate_laplacian_with_self_loop(adj):
    n = adj.shape[0]
    a = adj + jnp.eye(n, dtype=adj.dtype)
    row_sum = a.sum(1)
    d_inv_sqrt = jnp.power(row_sum, -0.5)
    d_inv_sqrt = jnp.where(jnp.isinf(d_inv_sqrt), 0.0, d_inv_sqrt)
    d = jnp.diag(d_inv_sqrt)
    return (a @ d).T @ d


def kaiming_normal(key, shape):
    # torch kaiming_normal_(mode='fan_in', nonlinearity='relu') on a 2-D tensor.
    std = jnp.sqrt(2.0 / shape[1])
    return std * jax.random.normal(key, shape, dtype=jnp.float32)


def make_params(key, num_nodes, input_dim, h1, h2, h3, h4, h5, h6, output_dim):
    keys = jax.random.split(key, 20)
    a_t = (jax.random.uniform(keys[0], (num_nodes, num_nodes)) < 0.3).astype(jnp.float32)
    a_s = (jax.random.uniform(keys[1], (num_nodes, num_nodes)) < 0.3).astype(jnp.float32)
    topo_adj = jnp.maximum(a_t, a_t.T)
    sim_adj = jnp.maximum(a_s, a_s.T)

    params = {
        "topo_L": calculate_laplacian_with_self_loop(topo_adj),
        "sim_L": calculate_laplacian_with_self_loop(sim_adj),
        "w1": kaiming_normal(keys[2], (input_dim, h1)),
        "w2": kaiming_normal(keys[3], (h1, h2)),
        "w3": kaiming_normal(keys[4], (h2, h3)),
        "w4": kaiming_normal(keys[5], (input_dim, h4)),
        "w5": kaiming_normal(keys[6], (h4, h5)),
        "w6": kaiming_normal(keys[7], (h5, h6)),
        "b1": kaiming_normal(keys[8], (num_nodes, h1)),
        "b2": kaiming_normal(keys[9], (num_nodes, h2)),
        "b3": kaiming_normal(keys[10], (num_nodes, h3)),
        "b4": kaiming_normal(keys[11], (num_nodes, h4)),
        "b5": kaiming_normal(keys[12], (num_nodes, h5)),
        "b6": kaiming_normal(keys[13], (num_nodes, h6)),
        "fc_w": (jax.random.normal(keys[14], (h3, output_dim), dtype=jnp.float32)
                 / jnp.sqrt(h3)),
        "fc_b": jax.random.normal(keys[15], (output_dim,), dtype=jnp.float32) * 0.01,
        "graph_weight": jnp.full((2,), 0.5, dtype=jnp.float32),
    }
    return params


if __name__ == "__main__":
    BATCH = 2
    NUM_NODES = 16
    INPUT_DIM = 1
    H1 = H4 = 32
    H2 = H5 = 32
    H3 = H6 = 32
    OUTPUT_DIM = 1

    key = jax.random.PRNGKey(0)
    k_x, k_p = jax.random.split(key)
    params = make_params(k_p, NUM_NODES, INPUT_DIM, H1, H2, H3, H4, H5, H6, OUTPUT_DIM)
    x = jax.random.normal(k_x, (BATCH, NUM_NODES), dtype=jnp.float32)

    out = mvgcn_forward(x, params)
    out = jax.block_until_ready(out)

    ref = mvgcn_reference(x, params)
    assert out.shape == (BATCH, NUM_NODES)
    assert jnp.allclose(out, ref, atol=1e-4, rtol=1e-4), (
        f"max abs err = {jnp.max(jnp.abs(out - ref))}")

    print("KERNEL_OK")
</pallas_src>

<mosaic_0001>
module attributes {stable_mosaic.version = 11 : i64} {
  func.func @mvgcn_kernel(%arg0: memref<1x1xf32, #tpu.memory_space<smem>>, %arg1: memref<32x1xf32, #tpu.memory_space<vmem>>, %arg2: memref<64x32xf32, #tpu.memory_space<vmem>>, %arg3: memref<2x32xf32, #tpu.memory_space<vmem>>, %arg4: memref<64x32xf32, #tpu.memory_space<vmem>>, %arg5: memref<64x32xf32, #tpu.memory_space<vmem>>, %arg6: memref<32x32xf32, #tpu.memory_space<vmem>>, %arg7: memref<32x32xf32, #tpu.memory_space<vmem>>, %arg8: memref<32x32xf32, #tpu.memory_space<vmem>>, %arg9: memref<1x32xf32, #tpu.memory_space<vmem>>, %arg10: memref<1x32xf32, #tpu.memory_space<vmem>>) attributes {dimension_semantics = [], scalar_prefetch = 0 : i64, scratch_operands = 0 : i64, tpu.core_type = #tpu.core_type<tc>} {
    %c0 = arith.constant 0 : index
    %c0_0 = arith.constant 0 : index
    %0 = vector.load %arg2[%c0, %c0_0] : memref<64x32xf32, #tpu.memory_space<vmem>>, vector<64x32xf32>
    %c0_1 = arith.constant 0 : index
    %c0_2 = arith.constant 0 : index
    %1 = vector.load %arg1[%c0_1, %c0_2] : memref<32x1xf32, #tpu.memory_space<vmem>>, vector<32x1xf32>
    %cst = arith.constant dense<0.000000e+00> : vector<64x1xf32>
    %2 = tpu.matmul %0, %1, %cst {dimension_numbers = #tpu.dot_dimension_numbers<[1], [0], [0], [1], [0, 0, 1, 1], [], []>} : vector<64x32xf32>, vector<32x1xf32>, vector<64x1xf32> -> vector<64x1xf32>
    %c0_3 = arith.constant 0 : index
    %c0_4 = arith.constant 0 : index
    %3 = vector.load %arg3[%c0_3, %c0_4] : memref<2x32xf32, #tpu.memory_space<vmem>>, vector<2x32xf32>
    %4 = vector.extract_strided_slice %2 {offsets = [0, 0], sizes = [32, 1], strides = [1, 1]} : vector<64x1xf32> to vector<32x1xf32>
    %5 = vector.extract_strided_slice %3 {offsets = [0, 0], sizes = [1, 32], strides = [1, 1]} : vector<2x32xf32> to vector<1x32xf32>
    %6 = vector.broadcast %4 : vector<32x1xf32> to vector<32x32xf32>
    %7 = vector.broadcast %5 : vector<1x32xf32> to vector<32x32xf32>
    %8 = arith.mulf %6, %7 : vector<32x32xf32>
    %9 = vector.extract_strided_slice %2 {offsets = [32, 0], sizes = [32, 1], strides = [1, 1]} : vector<64x1xf32> to vector<32x1xf32>
    %10 = vector.extract_strided_slice %3 {offsets = [1, 0], sizes = [1, 32], strides = [1, 1]} : vector<2x32xf32> to vector<1x32xf32>
    %11 = vector.broadcast %9 : vector<32x1xf32> to vector<32x32xf32>
    %12 = vector.broadcast %10 : vector<1x32xf32> to vector<32x32xf32>
    %13 = arith.mulf %11, %12 : vector<32x32xf32>
    %14 = arith.addf %8, %13 : vector<32x32xf32>
    %c0_5 = arith.constant 0 : index
    %c0_6 = arith.constant 0 : index
    %15 = vector.load %arg6[%c0_5, %c0_6] : memref<32x32xf32, #tpu.memory_space<vmem>>, vector<32x32xf32>
    %16 = arith.addf %14, %15 : vector<32x32xf32>
    %cst_7 = arith.constant 0.000000e+00 : f32
    %17 = vector.broadcast %cst_7 : f32 to vector<32x32xf32>
    %18 = arith.maximumf %16, %17 : vector<32x32xf32>
    %cst_8 = arith.constant dense<0.000000e+00> : vector<64x32xf32>
    %19 = tpu.matmul %0, %18, %cst_8 {dimension_numbers = #tpu.dot_dimension_numbers<[1], [0], [0], [1], [0, 0, 1, 1], [], []>} : vector<64x32xf32>, vector<32x32xf32>, vector<64x32xf32> -> vector<64x32xf32>
    %c0_9 = arith.constant 0 : index
    %c0_10 = arith.constant 0 : index
    %20 = vector.load %arg4[%c0_9, %c0_10] : memref<64x32xf32, #tpu.memory_space<vmem>>, vector<64x32xf32>
    %21 = vector.extract_strided_slice %19 {offsets = [0, 0], sizes = [32, 32], strides = [1, 1]} : vector<64x32xf32> to vector<32x32xf32>
    %22 = vector.extract_strided_slice %20 {offsets = [0, 0], sizes = [32, 32], strides = [1, 1]} : vector<64x32xf32> to vector<32x32xf32>
    %cst_11 = arith.constant dense<0.000000e+00> : vector<32x32xf32>
    %23 = tpu.matmul %21, %22, %cst_11 {dimension_numbers = #tpu.dot_dimension_numbers<[1], [0], [0], [1], [0, 0, 1, 1], [], []>} : vector<32x32xf32>, vector<32x32xf32>, vector<32x32xf32> -> vector<32x32xf32>
    %24 = vector.extract_strided_slice %19 {offsets = [32, 0], sizes = [32, 32], strides = [1, 1]} : vector<64x32xf32> to vector<32x32xf32>
    %25 = vector.extract_strided_slice %20 {offsets = [32, 0], sizes = [32, 32], strides = [1, 1]} : vector<64x32xf32> to vector<32x32xf32>
    %cst_12 = arith.constant dense<0.000000e+00> : vector<32x32xf32>
    %26 = tpu.matmul %24, %25, %cst_12 {dimension_numbers = #tpu.dot_dimension_numbers<[1], [0], [0], [1], [0, 0, 1, 1], [], []>} : vector<32x32xf32>, vector<32x32xf32>, vector<32x32xf32> -> vector<32x32xf32>
    %27 = arith.addf %23, %26 : vector<32x32xf32>
    %c0_13 = arith.constant 0 : index
    %c0_14 = arith.constant 0 : index
    %28 = vector.load %arg7[%c0_13, %c0_14] : memref<32x32xf32, #tpu.memory_space<vmem>>, vector<32x32xf32>
    %29 = arith.addf %27, %28 : vector<32x32xf32>
    %cst_15 = arith.constant 0.000000e+00 : f32
    %30 = vector.broadcast %cst_15 : f32 to vector<32x32xf32>
    %31 = arith.maximumf %29, %30 : vector<32x32xf32>
    %cst_16 = arith.constant dense<0.000000e+00> : vector<64x32xf32>
    %32 = tpu.matmul %0, %31, %cst_16 {dimension_numbers = #tpu.dot_dimension_numbers<[1], [0], [0], [1], [0, 0, 1, 1], [], []>} : vector<64x32xf32>, vector<32x32xf32>, vector<64x32xf32> -> vector<64x32xf32>
    %c0_17 = arith.constant 0 : index
    %c0_18 = arith.constant 0 : index
    %33 = vector.load %arg5[%c0_17, %c0_18] : memref<64x32xf32, #tpu.memory_space<vmem>>, vector<64x32xf32>
    %34 = vector.extract_strided_slice %32 {offsets = [0, 0], sizes = [32, 32], strides = [1, 1]} : vector<64x32xf32> to vector<32x32xf32>
    %35 = vector.extract_strided_slice %33 {offsets = [0, 0], sizes = [32, 32], strides = [1, 1]} : vector<64x32xf32> to vector<32x32xf32>
    %cst_19 = arith.constant dense<0.000000e+00> : vector<32x32xf32>
    %36 = tpu.matmul %34, %35, %cst_19 {dimension_numbers = #tpu.dot_dimension_numbers<[1], [0], [0], [1], [0, 0, 1, 1], [], []>} : vector<32x32xf32>, vector<32x32xf32>, vector<32x32xf32> -> vector<32x32xf32>
    %37 = vector.extract_strided_slice %32 {offsets = [32, 0], sizes = [32, 32], strides = [1, 1]} : vector<64x32xf32> to vector<32x32xf32>
    %38 = vector.extract_strided_slice %33 {offsets = [32, 0], sizes = [32, 32], strides = [1, 1]} : vector<64x32xf32> to vector<32x32xf32>
    %cst_20 = arith.constant dense<0.000000e+00> : vector<32x32xf32>
    %39 = tpu.matmul %37, %38, %cst_20 {dimension_numbers = #tpu.dot_dimension_numbers<[1], [0], [0], [1], [0, 0, 1, 1], [], []>} : vector<32x32xf32>, vector<32x32xf32>, vector<32x32xf32> -> vector<32x32xf32>
    %40 = arith.addf %36, %39 : vector<32x32xf32>
    %c0_21 = arith.constant 0 : index
    %c0_22 = arith.constant 0 : index
    %41 = vector.load %arg8[%c0_21, %c0_22] : memref<32x32xf32, #tpu.memory_space<vmem>>, vector<32x32xf32>
    %42 = arith.addf %40, %41 : vector<32x32xf32>
    %cst_23 = arith.constant 0.000000e+00 : f32
    %43 = vector.broadcast %cst_23 : f32 to vector<32x32xf32>
    %44 = arith.maximumf %42, %43 : vector<32x32xf32>
    %c0_24 = arith.constant 0 : index
    %c0_25 = arith.constant 0 : index
    %45 = vector.load %arg9[%c0_24, %c0_25] : memref<1x32xf32, #tpu.memory_space<vmem>>, vector<1x32xf32>
    %cst_26 = arith.constant dense<0.000000e+00> : vector<1x32xf32>
    %46 = tpu.matmul %45, %44, %cst_26 {dimension_numbers = #tpu.dot_dimension_numbers<[1], [1], [0], [0], [0, 0, 1, 0], [], []>} : vector<1x32xf32>, vector<32x32xf32>, vector<1x32xf32> -> vector<1x32xf32>
    %c0_27 = arith.constant 0 : index
    %c0_28 = arith.constant 0 : index
    %47 = memref.load %arg0[%c0_27, %c0_28] : memref<1x1xf32, #tpu.memory_space<smem>>
    %48 = vector.broadcast %47 : f32 to vector<1x32xf32>
    %49 = arith.addf %46, %48 : vector<1x32xf32>
    %c0_29 = arith.constant 0 : index
    %c0_30 = arith.constant 0 : index
    %50 = vector.load %arg10[%c0_29, %c0_30] : memref<1x32xf32, #tpu.memory_space<vmem>>, vector<1x32xf32>
    tpu.vector_store %arg10[%c0_29, %c0_30], %49 {strides = array<i32>} : memref<1x32xf32, #tpu.memory_space<vmem>>, vector<1x32xf32>,
    return
  }
}

</mosaic_0001>

<llo_original>
// kernel: mvgcn_forward.1
$region0: #{mvgcn_forward.1}
  #allocation0 [shape = 'u32[]', space=smem, size = 0x4, offset = 0x4, fixed_abs, tag = 'smem constant byte address 0x4 - core index']
  #allocation1 [shape = 'u32[144,128]{1,0:T(1,128)}', space=vmem, size = 0x12000, scoped, tag = 'internal scratch']
  #allocation2 [shape = 'f32[1,1]{1,0:T(1,128)S(6)}', space=smem, size = 0x200, scoped, tag = 'scoped memory for mvgcn_forward.1']
  %s0 = inlined_call_operand.<no memory space> [shape: f32[1,1], index: 0, kind: input, shape index: {}]
  %s1 = inlined_call_operand.vmem [shape: f32[32,1], index: 1, kind: input, shape index: {}]
  %s2 = inlined_call_operand.vmem [shape: f32[64,32], index: 2, kind: input, shape index: {}]
  %s3 = inlined_call_operand.vmem [shape: f32[2,32], index: 3, kind: input, shape index: {}]
  %s4 = inlined_call_operand.vmem [shape: f32[64,32], index: 4, kind: input, shape index: {}]
  %s5 = inlined_call_operand.vmem [shape: f32[64,32], index: 5, kind: input, shape index: {}]
  %s6 = inlined_call_operand.vmem [shape: f32[32,32], index: 6, kind: input, shape index: {}]
  %s7 = inlined_call_operand.vmem [shape: f32[32,32], index: 7, kind: input, shape index: {}]
  %s8 = inlined_call_operand.vmem [shape: f32[32,32], index: 8, kind: input, shape index: {}]
  %s9 = inlined_call_operand.vmem [shape: f32[1,32], index: 9, kind: input, shape index: {}]
  %s10 = inlined_call_operand.vmem [shape: f32[1,32], index: 10, kind: output, shape index: {}]
  %s11 = sld [smem:[#allocation0]]
  $region50: #{mvgcn_forward.1} parent=0
    _
  %s13 = ssub.s32 1, %s11
  %s14 = scalar_select 0, %s13, %s11
  %15 = sst [smem:[#allocation2]] %s0
  // Predicated region
  $region2: #{mvgcn_forward.1} parent=0 // pred_check
    _
  $region3: #{mvgcn_forward.1} parent=0 // pred_check_branch
    %17 = sbr.rel (0) target = $region5
  $region4: #{mvgcn_forward.1} parent=0 // pred_region
    _
  $region5: #{mvgcn_forward.1} parent=0 // pred_fallthru
    _
  // Predicated region
  $region6: #{mvgcn_forward.1} parent=0 // pred_check
    _
  $region7: #{mvgcn_forward.1} parent=0 // pred_check_branch
    %19 = sbr.rel (0) target = $region9
  $region8: #{mvgcn_forward.1} parent=0 // pred_region
    _
  $region9: #{mvgcn_forward.1} parent=0 // pred_fallthru
    _
  // Predicated region
  $region10: #{mvgcn_forward.1} parent=0 // pred_check
    _
  $region11: #{mvgcn_forward.1} parent=0 // pred_check_branch
    %21 = sbr.rel (0) target = $region13
  $region12: #{mvgcn_forward.1} parent=0 // pred_region
    _
  $region13: #{mvgcn_forward.1} parent=0 // pred_fallthru
    _
  // Predicated region
  $region14: #{mvgcn_forward.1} parent=0 // pred_check
    _
  $region15: #{mvgcn_forward.1} parent=0 // pred_check_branch
    %23 = sbr.rel (0) target = $region17
  $region16: #{mvgcn_forward.1} parent=0 // pred_region
    _
  $region17: #{mvgcn_forward.1} parent=0 // pred_fallthru
    _
  // Predicated region
  $region18: #{mvgcn_forward.1} parent=0 // pred_check
    _
  $region19: #{mvgcn_forward.1} parent=0 // pred_check_branch
    %25 = sbr.rel (0) target = $region21
  $region20: #{mvgcn_forward.1} parent=0 // pred_region
    _
  $region21: #{mvgcn_forward.1} parent=0 // pred_fallthru
    _
  // Predicated region
  $region22: #{mvgcn_forward.1} parent=0 // pred_check
    _
  $region23: #{mvgcn_forward.1} parent=0 // pred_check_branch
    %27 = sbr.rel (0) target = $region25
  $region24: #{mvgcn_forward.1} parent=0 // pred_region
    _
  $region25: #{mvgcn_forward.1} parent=0 // pred_fallthru
    _
  // Predicated region
  $region26: #{mvgcn_forward.1} parent=0 // pred_check
    _
  $region27: #{mvgcn_forward.1} parent=0 // pred_check_branch
    %29 = sbr.rel (0) target = $region29
  $region28: #{mvgcn_forward.1} parent=0 // pred_region
    _
  $region29: #{mvgcn_forward.1} parent=0 // pred_fallthru
    _
  // Predicated region
  $region30: #{mvgcn_forward.1} parent=0 // pred_check
    _
  $region31: #{mvgcn_forward.1} parent=0 // pred_check_branch
    %31 = sbr.rel (0) target = $region33
  $region32: #{mvgcn_forward.1} parent=0 // pred_region
    _
  $region33: #{mvgcn_forward.1} parent=0 // pred_fallthru
    _
  // Predicated region
  $region34: #{mvgcn_forward.1} parent=0 // pred_check
    _
  $region35: #{mvgcn_forward.1} parent=0 // pred_check_branch
    %33 = sbr.rel (0) target = $region37
  $region36: #{mvgcn_forward.1} parent=0 // pred_region
    _
  $region37: #{mvgcn_forward.1} parent=0 // pred_fallthru
    _
  // Predicated region
  $region38: #{mvgcn_forward.1} parent=0 // pred_check
    _
  $region39: #{mvgcn_forward.1} parent=0 // pred_check_branch
    %35 = sbr.rel (0) target = $region41
  $region40: #{mvgcn_forward.1} parent=0 // pred_region
    _
  $region41: #{mvgcn_forward.1} parent=0 // pred_fallthru
    _
  %v36 = vld [vmem:[%s2] sm:$0xff]
  %v37 = vld [vmem:[%s2 + $0x8] sm:$0xff]
  %v38 = vld [vmem:[%s2 + $0x10] sm:$0xff]
  %v39 = vld [vmem:[%s2 + $0x18] sm:$0xff]
  %v40 = vld [vmem:[%s2 + $0x20] sm:$0xff]
  %v41 = vld [vmem:[%s2 + $0x28] sm:$0xff]
  %v42 = vld [vmem:[%s2 + $0x30] sm:$0xff]
  %v43 = vld [vmem:[%s2 + $0x38] sm:$0xff]
  %v44 = vld [vmem:[%s1] sm:$0xff]
  %v45 = vld [vmem:[%s1 + $0x8] sm:$0xff]
  %v46 = vld [vmem:[%s1 + $0x10] sm:$0xff]
  %v47 = vld [vmem:[%s1 + $0x18] sm:$0xff]
  %vm48 = vcmask 261120
  %v50 = vsel %vm48, %v36, 0
  %v53 = vsel %vm48, %v37, 0
  %v56 = vsel %vm48, %v38, 0
  %v59 = vsel %vm48, %v39, 0
  %v62 = vsel %vm48, %v40, 0
  %v65 = vsel %vm48, %v41, 0
  %v68 = vsel %vm48, %v42, 0
  %v71 = vsel %vm48, %v43, 0
  %73 = vmatprep.subr.mxu0 0.0
  %74 = vmatpush1.msra.mxu0 %v44
  %75 = vmatprep.subr.mxu0 0.0
  %76 = vmatpush1.msra.mxu0 %v45
  %77 = vmatprep.subr.mxu0 0.0
  %78 = vmatpush1.msra.mxu0 %v46
  %79 = vmatprep.subr.mxu0 0.0
  %80 = vmatpush1.msra.mxu0 %v47
  %81 = vmatprep.subr.mxu0 0.0
  %82 = vmatpush1.msra.mxu0 0.0
  %83 = vmatprep.subr.mxu0 0.0
  %84 = vmatpush1.msra.mxu0 0.0
  %85 = vmatprep.subr.mxu0 0.0
  %86 = vmatpush1.msra.mxu0 0.0
  %87 = vmatprep.subr.mxu0 0.0
  %88 = vmatpush1.msra.mxu0 0.0
  %89 = vmatprep.subr.mxu0 0.0
  %90 = vmatpush1.msra.mxu0 0.0
  %91 = vmatprep.subr.mxu0 0.0
  %92 = vmatpush1.msra.mxu0 0.0
  %93 = vmatprep.subr.mxu0 0.0
  %94 = vmatpush1.msra.mxu0 0.0
  %95 = vmatprep.subr.mxu0 0.0
  %96 = vmatpush1.msra.mxu0 0.0
  %97 = vmatprep.subr.mxu0 0.0
  %98 = vmatpush1.msra.mxu0 0.0
  %99 = vmatprep.subr.mxu0 0.0
  %100 = vmatpush1.msra.mxu0 0.0
  %101 = vmatprep.subr.mxu0 0.0
  %102 = vmatpush1.msra.mxu0 0.0
  %103 = vmatprep.subr.mxu0 0.0
  %104 = vmatpush1.msra.mxu0 0.0
  %105 = vmatprep.subr.mxu0 0.0
  %106 = vmatpush1.msra.mxu0 0.0
  %107 = vmatprep.subr.mxu0 0.0
  %108 = vmatpush1.msra.mxu0 0.0
  %109 = vmatprep.subr.mxu0 0.0
  %110 = vmatpush1.msra.mxu0 0.0
  %111 = vmatprep.subr.mxu0 0.0
  %112 = vmatpush1.msra.mxu0 0.0
  %113 = vmatprep.subr.mxu0 0.0
  %114 = vmatpush1.msra.mxu0 0.0
  %115 = vmatprep.subr.mxu0 0.0
  %116 = vmatpush1.msra.mxu0 0.0
  %117 = vmatprep.subr.mxu0 0.0
  %118 = vmatpush1.msra.mxu0 0.0
  %119 = vmatprep.subr.mxu0 0.0
  %120 = vmatpush1.msra.mxu0 0.0
  %121 = vmatprep.subr.mxu0 0.0
  %122 = vmatpush1.msra.mxu0 0.0
  %123 = vmatprep.subr.mxu0 0.0
  %124 = vmatpush1.msra.mxu0 0.0
  %125 = vmatprep.subr.mxu0 0.0
  %126 = vmatpush1.msra.mxu0 0.0
  %127 = vmatprep.subr.mxu0 0.0
  %128 = vmatpush1.msra.mxu0 0.0
  %129 = vmatprep.subr.mxu0 0.0
  %130 = vmatpush1.msra.mxu0 0.0
  %131 = vmatprep.subr.mxu0 0.0
  %132 = vmatpush1.msra.mxu0 0.0
  %133 = vmatprep.subr.mxu0 0.0
  %134 = vmatpush1.msra.mxu0 0.0
  %135 = vmatprep.subr.mxu0 0.0
  %136 = vmatpush1.msra.mxu0 0.0
  %137 = vmatprep.mubr.f32.mxu0 0.0
  %138 = vmatmul.mubr.f32.gmra.mrb[0].mxu0 %v50
  %v139 = vpop.f32.mrb[0].mxu0
  %v140 = vadd.f32 0.0, %v139
  %v141 = vpop.f32.mrb[0].mxu0
  %142 = vmatprep.mubr.f32.mxu0 0.0
  %143 = vmatmul.mubr.f32.gmra.mrb[0].mxu0 %v53
  %v144 = vpop.f32.mrb[0].mxu0
  %v145 = vadd.f32 0.0, %v144
  %v146 = vpop.f32.mrb[0].mxu0
  %147 = vmatprep.mubr.f32.mxu0 0.0
  %148 = vmatmul.mubr.f32.gmra.mrb[0].mxu0 %v56
  %v149 = vpop.f32.mrb[0].mxu0
  %v150 = vadd.f32 0.0, %v149
  %v151 = vpop.f32.mrb[0].mxu0
  %152 = vmatprep.mubr.f32.mxu0 0.0
  %153 = vmatmul.mubr.f32.gmra.mrb[0].mxu0 %v59
  %v154 = vpop.f32.mrb[0].mxu0
  %v155 = vadd.f32 0.0, %v154
  %v156 = vpop.f32.mrb[0].mxu0
  %157 = vmatprep.mubr.f32.mxu0 0.0
  %158 = vmatmul.mubr.f32.gmra.mrb[0].mxu0 %v62
  %v159 = vpop.f32.mrb[0].mxu0
  %v160 = vadd.f32 0.0, %v159
  %v161 = vpop.f32.mrb[0].mxu0
  %162 = vmatprep.mubr.f32.mxu0 0.0
  %163 = vmatmul.mubr.f32.gmra.mrb[0].mxu0 %v65
  %v164 = vpop.f32.mrb[0].mxu0
  %v165 = vadd.f32 0.0, %v164
  %v166 = vpop.f32.mrb[0].mxu0
  %167 = vmatprep.mubr.f32.mxu0 0.0
  %168 = vmatmul.mubr.f32.gmra.mrb[0].mxu0 %v68
  %v169 = vpop.f32.mrb[0].mxu0
  %v170 = vadd.f32 0.0, %v169
  %v171 = vpop.f32.mrb[0].mxu0
  %172 = vmatprep.mubr.f32.mxu0 0.0
  %173 = vmatmul.mubr.f32.gmra.mrb[0].mxu0 %v71
  %v174 = vpop.f32.mrb[0].mxu0
  %v175 = vadd.f32 0.0, %v174
  %v176 = vpop.f32.mrb[0].mxu0
  %177 = vdwg.mxu0
  %v178 = vld [vmem:[%s3] sm:$0x3]
  %180 = vset.pattern.permute.xlu0 0
  %181 = vperm.xlu0 %180, %v140
  %v182 = vpop.permute.xlu0 %181
  %185 = vset.pattern.permute.xlu0 0
  %186 = vperm.xlu0 %185, %v145
  %v187 = vpop.permute.xlu0 %186
  %190 = vset.pattern.permute.xlu0 0
  %191 = vperm.xlu0 %190, %v150
  %v192 = vpop.permute.xlu0 %191
  %195 = vset.pattern.permute.xlu0 0
  %196 = vperm.xlu0 %195, %v155
  %v197 = vpop.permute.xlu0 %196
  %v199 = vlaneseq
  %v200 = vshrl.u32 %v199, 7
  %v201 = vsub.s32 0, %v200
  %v202 = vrot.slane %v178, %v201
  %v203 = vmul.f32 %v182, %v202
  %v204 = vmul.f32 %v187, %v202
  %v205 = vmul.f32 %v192, %v202
  %v206 = vmul.f32 %v197, %v202
  %208 = vset.pattern.permute.xlu0 0
  %209 = vperm.xlu0 %208, %v160
  %v210 = vpop.permute.xlu0 %209
  %213 = vset.pattern.permute.xlu0 0
  %214 = vperm.xlu0 %213, %v165
  %v215 = vpop.permute.xlu0 %214
  %218 = vset.pattern.permute.xlu0 0
  %219 = vperm.xlu0 %218, %v170
  %v220 = vpop.permute.xlu0 %219
  %223 = vset.pattern.permute.xlu0 0
  %224 = vperm.xlu0 %223, %v175
  %v225 = vpop.permute.xlu0 %224
  %v227 = vlaneseq
  %v228 = vshrl.u32 %v227, 7
  %v229 = vsub.s32 1, %v228
  %v230 = vrot.slane %v178, %v229
  %v231 = vmul.f32 %v210, %v230
  %v232 = vmul.f32 %v215, %v230
  %v233 = vmul.f32 %v220, %v230
  %v234 = vmul.f32 %v225, %v230
  %v235 = vadd.f32 %v203, %v231
  %v236 = vadd.f32 %v204, %v232
  %v237 = vadd.f32 %v205, %v233
  %v238 = vadd.f32 %v206, %v234
  %v239 = vld [vmem:[%s6] sm:$0xff]
  %v240 = vld [vmem:[%s6 + $0x8] sm:$0xff]
  %v241 = vld [vmem:[%s6 + $0x10] sm:$0xff]
  %v242 = vld [vmem:[%s6 + $0x18] sm:$0xff]
  %v243 = vadd.f32 %v235, %v239
  %v244 = vadd.f32 %v236, %v240
  %v245 = vadd.f32 %v237, %v241
  %v246 = vadd.f32 %v238, %v242
  %v247 = vmax.f32 %v243, 0.0
  %v248 = vmax.f32 %v244, 0.0
  %v249 = vmax.f32 %v245, 0.0
  %v250 = vmax.f32 %v246, 0.0
  %251 = vmatprep.subr.mxu0 0.0
  %252 = vmatpush1.msra.mxu0 %v247
  %253 = vmatprep.subr.mxu0 0.0
  %254 = vmatpush1.msra.mxu0 %v248
  %255 = vmatprep.subr.mxu0 0.0
  %256 = vmatpush1.msra.mxu0 %v249
  %257 = vmatprep.subr.mxu0 0.0
  %258 = vmatpush1.msra.mxu0 %v250
  %259 = vmatprep.subr.mxu0 0.0
  %260 = vmatpush1.msra.mxu0 0.0
  %261 = vmatprep.subr.mxu0 0.0
  %262 = vmatpush1.msra.mxu0 0.0
  %263 = vmatprep.subr.mxu0 0.0
  %264 = vmatpush1.msra.mxu0 0.0
  %265 = vmatprep.subr.mxu0 0.0
  %266 = vmatpush1.msra.mxu0 0.0
  %267 = vmatprep.subr.mxu0 0.0
  %268 = vmatpush1.msra.mxu0 0.0
  %269 = vmatprep.subr.mxu0 0.0
  %270 = vmatpush1.msra.mxu0 0.0
  %271 = vmatprep.subr.mxu0 0.0
  %272 = vmatpush1.msra.mxu0 0.0
  %273 = vmatprep.subr.mxu0 0.0
  %274 = vmatpush1.msra.mxu0 0.0
  %275 = vmatprep.subr.mxu0 0.0
  %276 = vmatpush1.msra.mxu0 0.0
  %277 = vmatprep.subr.mxu0 0.0
  %278 = vmatpush1.msra.mxu0 0.0
  %279 = vmatprep.subr.mxu0 0.0
  %280 = vmatpush1.msra.mxu0 0.0
  %281 = vmatprep.subr.mxu0 0.0
  %282 = vmatpush1.msra.mxu0 0.0
  %283 = vmatprep.subr.mxu0 0.0
  %284 = vmatpush1.msra.mxu0 0.0
  %285 = vmatprep.subr.mxu0 0.0
  %286 = vmatpush1.msra.mxu0 0.0
  %287 = vmatprep.subr.mxu0 0.0
  %288 = vmatpush1.msra.mxu0 0.0
  %289 = vmatprep.subr.mxu0 0.0
  %290 = vmatpush1.msra.mxu0 0.0
  %291 = vmatprep.subr.mxu0 0.0
  %292 = vmatpush1.msra.mxu0 0.0
  %293 = vmatprep.subr.mxu0 0.0
  %294 = vmatpush1.msra.mxu0 0.0
  %295 = vmatprep.subr.mxu0 0.0
  %296 = vmatpush1.msra.mxu0 0.0
  %297 = vmatprep.subr.mxu0 0.0
  %298 = vmatpush1.msra.mxu0 0.0
  %299 = vmatprep.subr.mxu0 0.0
  %300 = vmatpush1.msra.mxu0 0.0
  %301 = vmatprep.subr.mxu0 0.0
  %302 = vmatpush1.msra.mxu0 0.0
  %303 = vmatprep.subr.mxu0 0.0
  %304 = vmatpush1.msra.mxu0 0.0
  %305 = vmatprep.subr.mxu0 0.0
  %306 = vmatpush1.msra.mxu0 0.0
  %307 = vmatprep.subr.mxu0 0.0
  %308 = vmatpush1.msra.mxu0 0.0
  %309 = vmatprep.subr.mxu0 0.0
  %310 = vmatpush1.msra.mxu0 0.0
  %311 = vmatprep.subr.mxu0 0.0
  %312 = vmatpush1.msra.mxu0 0.0
  %313 = vmatprep.subr.mxu0 0.0
  %314 = vmatpush1.msra.mxu0 0.0
  %315 = vmatprep.mubr.f32.mxu0 0.0
  %316 = vmatmul.mubr.f32.gmra.mrb[0].mxu0 %v50
  %v317 = vpop.f32.mrb[0].mxu0
  %v318 = vadd.f32 0.0, %v317
  %v319 = vpop.f32.mrb[0].mxu0
  %320 = vmatprep.mubr.f32.mxu0 0.0
  %321 = vmatmul.mubr.f32.gmra.mrb[0].mxu0 %v53
  %v322 = vpop.f32.mrb[0].mxu0
  %v323 = vadd.f32 0.0, %v322
  %v324 = vpop.f32.mrb[0].mxu0
  %325 = vmatprep.mubr.f32.mxu0 0.0
  %326 = vmatmul.mubr.f32.gmra.mrb[0].mxu0 %v56
  %v327 = vpop.f32.mrb[0].mxu0
  %v328 = vadd.f32 0.0, %v327
  %v329 = vpop.f32.mrb[0].mxu0
  %330 = vmatprep.mubr.f32.mxu0 0.0
  %331 = vmatmul.mubr.f32.gmra.mrb[0].mxu0 %v59
  %v332 = vpop.f32.mrb[0].mxu0
  %v333 = vadd.f32 0.0, %v332
  %v334 = vpop.f32.mrb[0].mxu0
  %335 = vmatprep.mubr.f32.mxu0 0.0
  %336 = vmatmul.mubr.f32.gmra.mrb[0].mxu0 %v62
  %v337 = vpop.f32.mrb[0].mxu0
  %v338 = vadd.f32 0.0, %v337
  %v339 = vpop.f32.mrb[0].mxu0
  %340 = vmatprep.mubr.f32.mxu0 0.0
  %341 = vmatmul.mubr.f32.gmra.mrb[0].mxu0 %v65
  %v342 = vpop.f32.mrb[0].mxu0
  %v343 = vadd.f32 0.0, %v342
  %v344 = vpop.f32.mrb[0].mxu0
  %345 = vmatprep.mubr.f32.mxu0 0.0
  %346 = vmatmul.mubr.f32.gmra.mrb[0].mxu0 %v68
  %v347 = vpop.f32.mrb[0].mxu0
  %v348 = vadd.f32 0.0, %v347
  %v349 = vpop.f32.mrb[0].mxu0
  %350 = vmatprep.mubr.f32.mxu0 0.0
  %351 = vmatmul.mubr.f32.gmra.mrb[0].mxu0 %v71
  %v352 = vpop.f32.mrb[0].mxu0
  %v353 = vadd.f32 0.0, %v352
  %v354 = vpop.f32.mrb[0].mxu0
  %355 = vdwg.mxu0
  %v356 = vld [vmem:[%s4] sm:$0xff]
  %v357 = vld [vmem:[%s4 + $0x8] sm:$0xff]
  %v358 = vld [vmem:[%s4 + $0x10] sm:$0xff]
  %v359 = vld [vmem:[%s4 + $0x18] sm:$0xff]
  %v360 = vld [vmem:[%s4 + $0x20] sm:$0xff]
  %v361 = vld [vmem:[%s4 + $0x28] sm:$0xff]
  %v362 = vld [vmem:[%s4 + $0x30] sm:$0xff]
  %v363 = vld [vmem:[%s4 + $0x38] sm:$0xff]
  %v365 = vsel %vm48, %v338, 0
  %v368 = vsel %vm48, %v343, 0
  %v371 = vsel %vm48, %v348, 0
  %v374 = vsel %vm48, %v353, 0
  %376 = vmatprep.subr.mxu0 0.0
  %377 = vmatpush1.msra.mxu0 %v360
  %378 = vmatprep.subr.mxu0 0.0
  %379 = vmatpush1.msra.mxu0 %v361
  %380 = vmatprep.subr.mxu0 0.0
  %381 = vmatpush1.msra.mxu0 %v362
  %382 = vmatprep.subr.mxu0 0.0
  %383 = vmatpush1.msra.mxu0 %v363
  %384 = vmatprep.subr.mxu0 0.0
  %385 = vmatpush1.msra.mxu0 0.0
  %386 = vmatprep.subr.mxu0 0.0
  %387 = vmatpush1.msra.mxu0 0.0
  %388 = vmatprep.subr.mxu0 0.0
  %389 = vmatpush1.msra.mxu0 0.0
  %390 = vmatprep.subr.mxu0 0.0
  %391 = vmatpush1.msra.mxu0 0.0
  %392 = vmatprep.subr.mxu0 0.0
  %393 = vmatpush1.msra.mxu0 0.0
  %394 = vmatprep.subr.mxu0 0.0
  %395 = vmatpush1.msra.mxu0 0.0
  %396 = vmatprep.subr.mxu0 0.0
  %397 = vmatpush1.msra.mxu0 0.0
  %398 = vmatprep.subr.mxu0 0.0
  %399 = vmatpush1.msra.mxu0 0.0
  %400 = vmatprep.subr.mxu0 0.0
  %401 = vmatpush1.msra.mxu0 0.0
  %402 = vmatprep.subr.mxu0 0.0
  %403 = vmatpush1.msra.mxu0 0.0
  %404 = vmatprep.subr.mxu0 0.0
  %405 = vmatpush1.msra.mxu0 0.0
  %406 = vmatprep.subr.mxu0 0.0
  %407 = vmatpush1.msra.mxu0 0.0
  %408 = vmatprep.subr.mxu0 0.0
  %409 = vmatpush1.msra.mxu0 0.0
  %410 = vmatprep.subr.mxu0 0.0
  %411 = vmatpush1.msra.mxu0 0.0
  %412 = vmatprep.subr.mxu0 0.0
  %413 = vmatpush1.msra.mxu0 0.0
  %414 = vmatprep.subr.mxu0 0.0
  %415 = vmatpush1.msra.mxu0 0.0
  %416 = vmatprep.subr.mxu0 0.0
  %417 = vmatpush1.msra.mxu0 0.0
  %418 = vmatprep.subr.mxu0 0.0
  %419 = vmatpush1.msra.mxu0 0.0
  %420 = vmatprep.subr.mxu0 0.0
  %421 = vmatpush1.msra.mxu0 0.0
  %422 = vmatprep.subr.mxu0 0.0
  %423 = vmatpush1.msra.mxu0 0.0
  %424 = vmatprep.subr.mxu0 0.0
  %425 = vmatpush1.msra.mxu0 0.0
  %426 = vmatprep.subr.mxu0 0.0
  %427 = vmatpush1.msra.mxu0 0.0
  %428 = vmatprep.subr.mxu0 0.0
  %429 = vmatpush1.msra.mxu0 0.0
  %430 = vmatprep.subr.mxu0 0.0
  %431 = vmatpush1.msra.mxu0 0.0
  %432 = vmatprep.subr.mxu0 0.0
  %433 = vmatpush1.msra.mxu0 0.0
  %434 = vmatprep.subr.mxu0 0.0
  %435 = vmatpush1.msra.mxu0 0.0
  %436 = vmatprep.subr.mxu0 0.0
  %437 = vmatpush1.msra.mxu0 0.0
  %438 = vmatprep.subr.mxu0 0.0
  %439 = vmatpush1.msra.mxu0 0.0
  %440 = vmatprep.mubr.f32.mxu0 0.0
  %441 = vmatmul.mubr.f32.gmra.mrb[0].mxu0 %v365
  %v442 = vpop.f32.mrb[0].mxu0
  %v443 = vadd.f32 0.0, %v442
  %v444 = vpop.f32.mrb[0].mxu0
  %445 = vmatprep.mubr.f32.mxu0 0.0
  %446 = vmatmul.mubr.f32.gmra.mrb[0].mxu0 %v368
  %v447 = vpop.f32.mrb[0].mxu0
  %v448 = vadd.f32 0.0, %v447
  %v449 = vpop.f32.mrb[0].mxu0
  %450 = vmatprep.mubr.f32.mxu0 0.0
  %451 = vmatmul.mubr.f32.gmra.mrb[0].mxu0 %v371
  %v452 = vpop.f32.mrb[0].mxu0
  %v453 = vadd.f32 0.0, %v452
  %v454 = vpop.f32.mrb[0].mxu0
  %455 = vmatprep.mubr.f32.mxu0 0.0
  %456 = vmatmul.mubr.f32.gmra.mrb[0].mxu0 %v374
  %v457 = vpop.f32.mrb[0].mxu0
  %v458 = vadd.f32 0.0, %v457
  %v459 = vpop.f32.mrb[0].mxu0
  %460 = vdwg.mxu0
  %v462 = vsel %vm48, %v318, 0
  %v465 = vsel %vm48, %v323, 0
  %v468 = vsel %vm48, %v328, 0
  %v471 = vsel %vm48, %v333, 0
  %473 = vmatprep.subr.mxu0 0.0
  %474 = vmatpush1.msra.mxu0 %v356
  %475 = vmatprep.subr.mxu0 0.0
  %476 = vmatpush1.msra.mxu0 %v357
  %477 = vmatprep.subr.mxu0 0.0
  %478 = vmatpush1.msra.mxu0 %v358
  %479 = vmatprep.subr.mxu0 0.0
  %480 = vmatpush1.msra.mxu0 %v359
  %481 = vmatprep.subr.mxu0 0.0
  %482 = vmatpush1.msra.mxu0 0.0
  %483 = vmatprep.subr.mxu0 0.0
  %484 = vmatpush1.msra.mxu0 0.0
  %485 = vmatprep.subr.mxu0 0.0
  %486 = vmatpush1.msra.mxu0 0.0
  %487 = vmatprep.subr.mxu0 0.0
  %488 = vmatpush1.msra.mxu0 0.0
  %489 = vmatprep.subr.mxu0 0.0
  %490 = vmatpush1.msra.mxu0 0.0
  %491 = vmatprep.subr.mxu0 0.0
  %492 = vmatpush1.msra.mxu0 0.0
  %493 = vmatprep.subr.mxu0 0.0
  %494 = vmatpush1.msra.mxu0 0.0
  %495 = vmatprep.subr.mxu0 0.0
  %496 = vmatpush1.msra.mxu0 0.0
  %497 = vmatprep.subr.mxu0 0.0
  %498 = vmatpush1.msra.mxu0 0.0
  %499 = vmatprep.subr.mxu0 0.0
  %500 = vmatpush1.msra.mxu0 0.0
  %501 = vmatprep.subr.mxu0 0.0
  %502 = vmatpush1.msra.mxu0 0.0
  %503 = vmatprep.subr.mxu0 0.0
  %504 = vmatpush1.msra.mxu0 0.0
  %505 = vmatprep.subr.mxu0 0.0
  %506 = vmatpush1.msra.mxu0 0.0
  %507 = vmatprep.subr.mxu0 0.0
  %508 = vmatpush1.msra.mxu0 0.0
  %509 = vmatprep.subr.mxu0 0.0
  %510 = vmatpush1.msra.mxu0 0.0
  %511 = vmatprep.subr.mxu0 0.0
  %512 = vmatpush1.msra.mxu0 0.0
  %513 = vmatprep.subr.mxu0 0.0
  %514 = vmatpush1.msra.mxu0 0.0
  %515 = vmatprep.subr.mxu0 0.0
  %516 = vmatpush1.msra.mxu0 0.0
  %517 = vmatprep.subr.mxu0 0.0
  %518 = vmatpush1.msra.mxu0 0.0
  %519 = vmatprep.subr.mxu0 0.0
  %520 = vmatpush1.msra.mxu0 0.0
  %521 = vmatprep.subr.mxu0 0.0
  %522 = vmatpush1.msra.mxu0 0.0
  %523 = vmatprep.subr.mxu0 0.0
  %524 = vmatpush1.msra.mxu0 0.0
  %525 = vmatprep.subr.mxu0 0.0
  %526 = vmatpush1.msra.mxu0 0.0
  %527 = vmatprep.subr.mxu0 0.0
  %528 = vmatpush1.msra.mxu0 0.0
  %529 = vmatprep.subr.mxu0 0.0
  %530 = vmatpush1.msra.mxu0 0.0
  %531 = vmatprep.subr.mxu0 0.0
  %532 = vmatpush1.msra.mxu0 0.0
  %533 = vmatprep.subr.mxu0 0.0
  %534 = vmatpush1.msra.mxu0 0.0
  %535 = vmatprep.subr.mxu0 0.0
  %536 = vmatpush1.msra.mxu0 0.0
  %537 = vmatprep.mubr.f32.mxu0 0.0
  %538 = vmatmul.mubr.f32.gmra.mrb[0].mxu0 %v462
  %v539 = vpop.f32.mrb[0].mxu0
  %v540 = vadd.f32 %v443, %v539
  %v541 = vpop.f32.mrb[0].mxu0
  %542 = vmatprep.mubr.f32.mxu0 0.0
  %543 = vmatmul.mubr.f32.gmra.mrb[0].mxu0 %v465
  %v544 = vpop.f32.mrb[0].mxu0
  %v545 = vadd.f32 %v448, %v544
  %v546 = vpop.f32.mrb[0].mxu0
  %547 = vmatprep.mubr.f32.mxu0 0.0
  %548 = vmatmul.mubr.f32.gmra.mrb[0].mxu0 %v468
  %v549 = vpop.f32.mrb[0].mxu0
  %v550 = vadd.f32 %v453, %v549
  %v551 = vpop.f32.mrb[0].mxu0
  %552 = vmatprep.mubr.f32.mxu0 0.0
  %553 = vmatmul.mubr.f32.gmra.mrb[0].mxu0 %v471
  %v554 = vpop.f32.mrb[0].mxu0
  %v555 = vadd.f32 %v458, %v554
  %v556 = vpop.f32.mrb[0].mxu0
  %557 = vdwg.mxu0
  %v558 = vld [vmem:[%s7] sm:$0xff]
  %v559 = vld [vmem:[%s7 + $0x8] sm:$0xff]
  %v560 = vld [vmem:[%s7 + $0x10] sm:$0xff]
  %v561 = vld [vmem:[%s7 + $0x18] sm:$0xff]
  %v562 = vadd.f32 %v540, %v558
  %v563 = vadd.f32 %v545, %v559
  %v564 = vadd.f32 %v550, %v560
  %v565 = vadd.f32 %v555, %v561
  %v566 = vmax.f32 %v562, 0.0
  %v567 = vmax.f32 %v563, 0.0
  %v568 = vmax.f32 %v564, 0.0
  %v569 = vmax.f32 %v565, 0.0
  %570 = vmatprep.subr.mxu0 0.0
  %571 = vmatpush1.msra.mxu0 %v566
  %572 = vmatprep.subr.mxu0 0.0
  %573 = vmatpush1.msra.mxu0 %v567
  %574 = vmatprep.subr.mxu0 0.0
  %575 = vmatpush1.msra.mxu0 %v568
  %576 = vmatprep.subr.mxu0 0.0
  %577 = vmatpush1.msra.mxu0 %v569
  %578 = vmatprep.subr.mxu0 0.0
  %579 = vmatpush1.msra.mxu0 0.0
  %580 = vmatprep.subr.mxu0 0.0
  %581 = vmatpush1.msra.mxu0 0.0
  %582 = vmatprep.subr.mxu0 0.0
  %583 = vmatpush1.msra.mxu0 0.0
  %584 = vmatprep.subr.mxu0 0.0
  %585 = vmatpush1.msra.mxu0 0.0
  %586 = vmatprep.subr.mxu0 0.0
  %587 = vmatpush1.msra.mxu0 0.0
  %588 = vmatprep.subr.mxu0 0.0
  %589 = vmatpush1.msra.mxu0 0.0
  %590 = vmatprep.subr.mxu0 0.0
  %591 = vmatpush1.msra.mxu0 0.0
  %592 = vmatprep.subr.mxu0 0.0
  %593 = vmatpush1.msra.mxu0 0.0
  %594 = vmatprep.subr.mxu0 0.0
  %595 = vmatpush1.msra.mxu0 0.0
  %596 = vmatprep.subr.mxu0 0.0
  %597 = vmatpush1.msra.mxu0 0.0
  %598 = vmatprep.subr.mxu0 0.0
  %599 = vmatpush1.msra.mxu0 0.0
  %600 = vmatprep.subr.mxu0 0.0
  %601 = vmatpush1.msra.mxu0 0.0
  %602 = vmatprep.subr.mxu0 0.0
  %603 = vmatpush1.msra.mxu0 0.0
  %604 = vmatprep.subr.mxu0 0.0
  %605 = vmatpush1.msra.mxu0 0.0
  %606 = vmatprep.subr.mxu0 0.0
  %607 = vmatpush1.msra.mxu0 0.0
  %608 = vmatprep.subr.mxu0 0.0
  %609 = vmatpush1.msra.mxu0 0.0
  %610 = vmatprep.subr.mxu0 0.0
  %611 = vmatpush1.msra.mxu0 0.0
  %612 = vmatprep.subr.mxu0 0.0
  %613 = vmatpush1.msra.mxu0 0.0
  %614 = vmatprep.subr.mxu0 0.0
  %615 = vmatpush1.msra.mxu0 0.0
  %616 = vmatprep.subr.mxu0 0.0
  %617 = vmatpush1.msra.mxu0 0.0
  %618 = vmatprep.subr.mxu0 0.0
  %619 = vmatpush1.msra.mxu0 0.0
  %620 = vmatprep.subr.mxu0 0.0
  %621 = vmatpush1.msra.mxu0 0.0
  %622 = vmatprep.subr.mxu0 0.0
  %623 = vmatpush1.msra.mxu0 0.0
  %624 = vmatprep.subr.mxu0 0.0
  %625 = vmatpush1.msra.mxu0 0.0
  %626 = vmatprep.subr.mxu0 0.0
  %627 = vmatpush1.msra.mxu0 0.0
  %628 = vmatprep.subr.mxu0 0.0
  %629 = vmatpush1.msra.mxu0 0.0
  %630 = vmatprep.subr.mxu0 0.0
  %631 = vmatpush1.msra.mxu0 0.0
  %632 = vmatprep.subr.mxu0 0.0
  %633 = vmatpush1.msra.mxu0 0.0
  %634 = vmatprep.mubr.f32.mxu0 0.0
  %635 = vmatmul.mubr.f32.gmra.mrb[0].mxu0 %v50
  %v636 = vpop.f32.mrb[0].mxu0
  %v637 = vadd.f32 0.0, %v636
  %v638 = vpop.f32.mrb[0].mxu0
  %639 = vmatprep.mubr.f32.mxu0 0.0
  %640 = vmatmul.mubr.f32.gmra.mrb[0].mxu0 %v53
  %v641 = vpop.f32.mrb[0].mxu0
  %v642 = vadd.f32 0.0, %v641
  %v643 = vpop.f32.mrb[0].mxu0
  %644 = vmatprep.mubr.f32.mxu0 0.0
  %645 = vmatmul.mubr.f32.gmra.mrb[0].mxu0 %v56
  %v646 = vpop.f32.mrb[0].mxu0
  %v647 = vadd.f32 0.0, %v646
  %v648 = vpop.f32.mrb[0].mxu0
  %649 = vmatprep.mubr.f32.mxu0 0.0
  %650 = vmatmul.mubr.f32.gmra.mrb[0].mxu0 %v59
  %v651 = vpop.f32.mrb[0].mxu0
  %v652 = vadd.f32 0.0, %v651
  %v653 = vpop.f32.mrb[0].mxu0
  %654 = vmatprep.mubr.f32.mxu0 0.0
  %655 = vmatmul.mubr.f32.gmra.mrb[0].mxu0 %v62
  %v656 = vpop.f32.mrb[0].mxu0
  %v657 = vadd.f32 0.0, %v656
  %v658 = vpop.f32.mrb[0].mxu0
  %659 = vmatprep.mubr.f32.mxu0 0.0
  %660 = vmatmul.mubr.f32.gmra.mrb[0].mxu0 %v65
  %v661 = vpop.f32.mrb[0].mxu0
  %v662 = vadd.f32 0.0, %v661
  %v663 = vpop.f32.mrb[0].mxu0
  %664 = vmatprep.mubr.f32.mxu0 0.0
  %665 = vmatmul.mubr.f32.gmra.mrb[0].mxu0 %v68
  %v666 = vpop.f32.mrb[0].mxu0
  %v667 = vadd.f32 0.0, %v666
  %v668 = vpop.f32.mrb[0].mxu0
  %669 = vmatprep.mubr.f32.mxu0 0.0
  %670 = vmatmul.mubr.f32.gmra.mrb[0].mxu0 %v71
  %v671 = vpop.f32.mrb[0].mxu0
  %v672 = vadd.f32 0.0, %v671
  %v673 = vpop.f32.mrb[0].mxu0
  %674 = vdwg.mxu0
  %v675 = vld [vmem:[%s5] sm:$0xff]
  %v676 = vld [vmem:[%s5 + $0x8] sm:$0xff]
  %v677 = vld [vmem:[%s5 + $0x10] sm:$0xff]
  %v678 = vld [vmem:[%s5 + $0x18] sm:$0xff]
  %v679 = vld [vmem:[%s5 + $0x20] sm:$0xff]
  %v680 = vld [vmem:[%s5 + $0x28] sm:$0xff]
  %v681 = vld [vmem:[%s5 + $0x30] sm:$0xff]
  %v682 = vld [vmem:[%s5 + $0x38] sm:$0xff]
  %v684 = vsel %vm48, %v657, 0
  %v687 = vsel %vm48, %v662, 0
  %v690 = vsel %vm48, %v667, 0
  %v693 = vsel %vm48, %v672, 0
  %695 = vmatprep.subr.mxu0 0.0
  %696 = vmatpush1.msra.mxu0 %v679
  %697 = vmatprep.subr.mxu0 0.0
  %698 = vmatpush1.msra.mxu0 %v680
  %699 = vmatprep.subr.mxu0 0.0
  %700 = vmatpush1.msra.mxu0 %v681
  %701 = vmatprep.subr.mxu0 0.0
  %702 = vmatpush1.msra.mxu0 %v682
  %703 = vmatprep.subr.mxu0 0.0
  %704 = vmatpush1.msra.mxu0 0.0
  %705 = vmatprep.subr.mxu0 0.0
  %706 = vmatpush1.msra.mxu0 0.0
  %707 = vmatprep.subr.mxu0 0.0
  %708 = vmatpush1.msra.mxu0 0.0
  %709 = vmatprep.subr.mxu0 0.0
  %710 = vmatpush1.msra.mxu0 0.0
  %711 = vmatprep.subr.mxu0 0.0
  %712 = vmatpush1.msra.mxu0 0.0
  %713 = vmatprep.subr.mxu0 0.0
  %714 = vmatpush1.msra.mxu0 0.0
  %715 = vmatprep.subr.mxu0 0.0
  %716 = vmatpush1.msra.mxu0 0.0
  %717 = vmatprep.subr.mxu0 0.0
  %718 = vmatpush1.msra.mxu0 0.0
  %719 = vmatprep.subr.mxu0 0.0
  %720 = vmatpush1.msra.mxu0 0.0
  %721 = vmatprep.subr.mxu0 0.0
  %722 = vmatpush1.msra.mxu0 0.0
  %723 = vmatprep.subr.mxu0 0.0
  %724 = vmatpush1.msra.mxu0 0.0
  %725 = vmatprep.subr.mxu0 0.0
  %726 = vmatpush1.msra.mxu0 0.0
  %727 = vmatprep.subr.mxu0 0.0
  %728 = vmatpush1.msra.mxu0 0.0
  %729 = vmatprep.subr.mxu0 0.0
  %730 = vmatpush1.msra.mxu0 0.0
  %731 = vmatprep.subr.mxu0 0.0
  %732 = vmatpush1.msra.mxu0 0.0
  %733 = vmatprep.subr.mxu0 0.0
  %734 = vmatpush1.msra.mxu0 0.0
  %735 = vmatprep.subr.mxu0 0.0
  %736 = vmatpush1.msra.mxu0 0.0
  %737 = vmatprep.subr.mxu0 0.0
  %738 = vmatpush1.msra.mxu0 0.0
  %739 = vmatprep.subr.mxu0 0.0
  %740 = vmatpush1.msra.mxu0 0.0
  %741 = vmatprep.subr.mxu0 0.0
  %742 = vmatpush1.msra.mxu0 0.0
  %743 = vmatprep.subr.mxu0 0.0
  %744 = vmatpush1.msra.mxu0 0.0
  %745 = vmatprep.subr.mxu0 0.0
  %746 = vmatpush1.msra.mxu0 0.0
  %747 = vmatprep.subr.mxu0 0.0
  %748 = vmatpush1.msra.mxu0 0.0
  %749 = vmatprep.subr.mxu0 0.0
  %750 = vmatpush1.msra.mxu0 0.0
  %751 = vmatprep.subr.mxu0 0.0
  %752 = vmatpush1.msra.mxu0 0.0
  %753 = vmatprep.subr.mxu0 0.0
  %754 = vmatpush1.msra.mxu0 0.0
  %755 = vmatprep.subr.mxu0 0.0
  %756 = vmatpush1.msra.mxu0 0.0
  %757 = vmatprep.subr.mxu0 0.0
  %758 = vmatpush1.msra.mxu0 0.0
  %759 = vmatprep.mubr.f32.mxu0 0.0
  %760 = vmatmul.mubr.f32.gmra.mrb[0].mxu0 %v684
  %v761 = vpop.f32.mrb[0].mxu0
  %v762 = vadd.f32 0.0, %v761
  %v763 = vpop.f32.mrb[0].mxu0
  %764 = vmatprep.mubr.f32.mxu0 0.0
  %765 = vmatmul.mubr.f32.gmra.mrb[0].mxu0 %v687
  %v766 = vpop.f32.mrb[0].mxu0
  %v767 = vadd.f32 0.0, %v766
  %v768 = vpop.f32.mrb[0].mxu0
  %769 = vmatprep.mubr.f32.mxu0 0.0
  %770 = vmatmul.mubr.f32.gmra.mrb[0].mxu0 %v690
  %v771 = vpop.f32.mrb[0].mxu0
  %v772 = vadd.f32 0.0, %v771
  %v773 = vpop.f32.mrb[0].mxu0
  %774 = vmatprep.mubr.f32.mxu0 0.0
  %775 = vmatmul.mubr.f32.gmra.mrb[0].mxu0 %v693
  %v776 = vpop.f32.mrb[0].mxu0
  %v777 = vadd.f32 0.0, %v776
  %v778 = vpop.f32.mrb[0].mxu0
  %779 = vdwg.mxu0
  %v781 = vsel %vm48, %v637, 0
  %v784 = vsel %vm48, %v642, 0
  %v787 = vsel %vm48, %v647, 0
  %v790 = vsel %vm48, %v652, 0
  %792 = vmatprep.subr.mxu0 0.0
  %793 = vmatpush1.msra.mxu0 %v675
  %794 = vmatprep.subr.mxu0 0.0
  %795 = vmatpush1.msra.mxu0 %v676
  %796 = vmatprep.subr.mxu0 0.0
  %797 = vmatpush1.msra.mxu0 %v677
  %798 = vmatprep.subr.mxu0 0.0
  %799 = vmatpush1.msra.mxu0 %v678
  %800 = vmatprep.subr.mxu0 0.0
  %801 = vmatpush1.msra.mxu0 0.0
  %802 = vmatprep.subr.mxu0 0.0
  %803 = vmatpush1.msra.mxu0 0.0
  %804 = vmatprep.subr.mxu0 0.0
  %805 = vmatpush1.msra.mxu0 0.0
  %806 = vmatprep.subr.mxu0 0.0
  %807 = vmatpush1.msra.mxu0 0.0
  %808 = vmatprep.subr.mxu0 0.0
  %809 = vmatpush1.msra.mxu0 0.0
  %810 = vmatprep.subr.mxu0 0.0
  %811 = vmatpush1.msra.mxu0 0.0
  %812 = vmatprep.subr.mxu0 0.0
  %813 = vmatpush1.msra.mxu0 0.0
  %814 = vmatprep.subr.mxu0 0.0
  %815 = vmatpush1.msra.mxu0 0.0
  %816 = vmatprep.subr.mxu0 0.0
  %817 = vmatpush1.msra.mxu0 0.0
  %818 = vmatprep.subr.mxu0 0.0
  %819 = vmatpush1.msra.mxu0 0.0
  %820 = vmatprep.subr.mxu0 0.0
  %821 = vmatpush1.msra.mxu0 0.0
  %822 = vmatprep.subr.mxu0 0.0
  %823 = vmatpush1.msra.mxu0 0.0
  %824 = vmatprep.subr.mxu0 0.0
  %825 = vmatpush1.msra.mxu0 0.0
  %826 = vmatprep.subr.mxu0 0.0
  %827 = vmatpush1.msra.mxu0 0.0
  %828 = vmatprep.subr.mxu0 0.0
  %829 = vmatpush1.msra.mxu0 0.0
  %830 = vmatprep.subr.mxu0 0.0
  %831 = vmatpush1.msra.mxu0 0.0
  %832 = vmatprep.subr.mxu0 0.0
  %833 = vmatpush1.msra.mxu0 0.0
  %834 = vmatprep.subr.mxu0 0.0
  %835 = vmatpush1.msra.mxu0 0.0
  %836 = vmatprep.subr.mxu0 0.0
  %837 = vmatpush1.msra.mxu0 0.0
  %838 = vmatprep.subr.mxu0 0.0
  %839 = vmatpush1.msra.mxu0 0.0
  %840 = vmatprep.subr.mxu0 0.0
  %841 = vmatpush1.msra.mxu0 0.0
  %842 = vmatprep.subr.mxu0 0.0
  %843 = vmatpush1.msra.mxu0 0.0
  %844 = vmatprep.subr.mxu0 0.0
  %845 = vmatpush1.msra.mxu0 0.0
  %846 = vmatprep.subr.mxu0 0.0
  %847 = vmatpush1.msra.mxu0 0.0
  %848 = vmatprep.subr.mxu0 0.0
  %849 = vmatpush1.msra.mxu0 0.0
  %850 = vmatprep.subr.mxu0 0.0
  %851 = vmatpush1.msra.mxu0 0.0
  %852 = vmatprep.subr.mxu0 0.0
  %853 = vmatpush1.msra.mxu0 0.0
  %854 = vmatprep.subr.mxu0 0.0
  %855 = vmatpush1.msra.mxu0 0.0
  %856 = vmatprep.mubr.f32.mxu0 0.0
  %857 = vmatmul.mubr.f32.gmra.mrb[0].mxu0 %v781
  %v858 = vpop.f32.mrb[0].mxu0
  %v859 = vadd.f32 %v762, %v858
  %v860 = vpop.f32.mrb[0].mxu0
  %861 = vmatprep.mubr.f32.mxu0 0.0
  %862 = vmatmul.mubr.f32.gmra.mrb[0].mxu0 %v784
  %v863 = vpop.f32.mrb[0].mxu0
  %v864 = vadd.f32 %v767, %v863
  %v865 = vpop.f32.mrb[0].mxu0
  %866 = vmatprep.mubr.f32.mxu0 0.0
  %867 = vmatmul.mubr.f32.gmra.mrb[0].mxu0 %v787
  %v868 = vpop.f32.mrb[0].mxu0
  %v869 = vadd.f32 %v772, %v868
  %v870 = vpop.f32.mrb[0].mxu0
  %871 = vmatprep.mubr.f32.mxu0 0.0
  %872 = vmatmul.mubr.f32.gmra.mrb[0].mxu0 %v790
  %v873 = vpop.f32.mrb[0].mxu0
  %v874 = vadd.f32 %v777, %v873
  %v875 = vpop.f32.mrb[0].mxu0
  %876 = vdwg.mxu0
  %v877 = vld [vmem:[%s8] sm:$0xff]
  %v878 = vld [vmem:[%s8 + $0x8] sm:$0xff]
  %v879 = vld [vmem:[%s8 + $0x10] sm:$0xff]
  %v880 = vld [vmem:[%s8 + $0x18] sm:$0xff]
  %v881 = vadd.f32 %v859, %v877
  %v882 = vadd.f32 %v864, %v878
  %v883 = vadd.f32 %v869, %v879
  %v884 = vadd.f32 %v874, %v880
  %v885 = vmax.f32 %v881, 0.0
  %v886 = vmax.f32 %v882, 0.0
  %v887 = vmax.f32 %v883, 0.0
  %v888 = vmax.f32 %v884, 0.0
  %v889 = vld [vmem:[%s9] sm:$0x1]
  %s890 = sld [smem:[#allocation2]]
  %v891 = vstv %s890
  %v893 = vsel %vm48, %v889, 0
  %v896 = vsel %vm48, %v885, 0
  %v899 = vsel %vm48, %v886, 0
  %v902 = vsel %vm48, %v887, 0
  %v905 = vsel %vm48, %v888, 0
  %907 = vmatprep.subr.mxu0 0.0
  %908 = vmatpush1.xpose.msra.mxu0 %v896
  %909 = vmatprep.subr.mxu0 0.0
  %910 = vmatpush1.xpose.msra.mxu0 %v899
  %911 = vmatprep.subr.mxu0 0.0
  %912 = vmatpush1.xpose.msra.mxu0 %v902
  %913 = vmatprep.subr.mxu0 0.0
  %914 = vmatpush1.xpose.msra.mxu0 %v905
  %915 = vmatprep.subr.mxu0 0.0
  %916 = vmatpush1.xpose.msra.mxu0 0.0
  %917 = vmatprep.subr.mxu0 0.0
  %918 = vmatpush1.xpose.msra.mxu0 0.0
  %919 = vmatprep.subr.mxu0 0.0
  %920 = vmatpush1.xpose.msra.mxu0 0.0
  %921 = vmatprep.subr.mxu0 0.0
  %922 = vmatpush1.xpose.msra.mxu0 0.0
  %923 = vmatprep.subr.mxu0 0.0
  %924 = vmatpush1.xpose.msra.mxu0 0.0
  %925 = vmatprep.subr.mxu0 0.0
  %926 = vmatpush1.xpose.msra.mxu0 0.0
  %927 = vmatprep.subr.mxu0 0.0
  %928 = vmatpush1.xpose.msra.mxu0 0.0
  %929 = vmatprep.subr.mxu0 0.0
  %930 = vmatpush1.xpose.msra.mxu0 0.0
  %931 = vmatprep.subr.mxu0 0.0
  %932 = vmatpush1.xpose.msra.mxu0 0.0
  %933 = vmatprep.subr.mxu0 0.0
  %934 = vmatpush1.xpose.msra.mxu0 0.0
  %935 = vmatprep.subr.mxu0 0.0
  %936 = vmatpush1.xpose.msra.mxu0 0.0
  %937 = vmatprep.subr.mxu0 0.0
  %938 = vmatpush1.xpose.msra.mxu0 0.0
  %939 = vmatprep.subr.mxu0 0.0
  %940 = vmatpush1.xpose.msra.mxu0 0.0
  %941 = vmatprep.subr.mxu0 0.0
  %942 = vmatpush1.xpose.msra.mxu0 0.0
  %943 = vmatprep.subr.mxu0 0.0
  %944 = vmatpush1.xpose.msra.mxu0 0.0
  %945 = vmatprep.subr.mxu0 0.0
  %946 = vmatpush1.xpose.msra.mxu0 0.0
  %947 = vmatprep.subr.mxu0 0.0
  %948 = vmatpush1.xpose.msra.mxu0 0.0
  %949 = vmatprep.subr.mxu0 0.0
  %950 = vmatpush1.xpose.msra.mxu0 0.0
  %951 = vmatprep.subr.mxu0 0.0
  %952 = vmatpush1.xpose.msra.mxu0 0.0
  %953 = vmatprep.subr.mxu0 0.0
  %954 = vmatpush1.xpose.msra.mxu0 0.0
  %955 = vmatprep.subr.mxu0 0.0
  %956 = vmatpush1.xpose.msra.mxu0 0.0
  %957 = vmatprep.subr.mxu0 0.0
  %958 = vmatpush1.xpose.msra.mxu0 0.0
  %959 = vmatprep.subr.mxu0 0.0
  %960 = vmatpush1.xpose.msra.mxu0 0.0
  %961 = vmatprep.subr.mxu0 0.0
  %962 = vmatpush1.xpose.msra.mxu0 0.0
  %963 = vmatprep.subr.mxu0 0.0
  %964 = vmatpush1.xpose.msra.mxu0 0.0
  %965 = vmatprep.subr.mxu0 0.0
  %966 = vmatpush1.xpose.msra.mxu0 0.0
  %967 = vmatprep.subr.mxu0 0.0
  %968 = vmatpush1.xpose.msra.mxu0 0.0
  %969 = vmatprep.subr.mxu0 0.0
  %970 = vmatpush1.xpose.msra.mxu0 0.0
  %971 = vmatprep.mubr.f32.mxu0 0.0
  %972 = vmatmul.mubr.f32.gmra.mrb[0].mxu0 %v893
  %v973 = vpop.f32.mrb[0].mxu0
  %v974 = vadd.f32 %v891, %v973
  %v975 = vpop.f32.mrb[0].mxu0
  %976 = vdwg.mxu0
  %vm977 = vcmask 253952
  %978 = vst.msk [vmem:[%s10] sm:$0x1] %vm977, %v974
  // Predicated region
  $region42: #{mvgcn_forward.1} parent=0 // pred_check
    _
  $region43: #{mvgcn_forward.1} parent=0 // pred_check_branch
    %980 = sbr.rel (0) target = $region45
  $region44: #{mvgcn_forward.1} parent=0 // pred_region
    _
  $region45: #{mvgcn_forward.1} parent=0 // pred_fallthru
    _
  // Predicated region
  $region46: #{mvgcn_forward.1} parent=0 // pred_check
    _
  $region47: #{mvgcn_forward.1} parent=0 // pred_check_branch
    %982 = sbr.rel (0) target = $region49
  $region48: #{mvgcn_forward.1} parent=0 // pred_region
    _
  $region49: #{mvgcn_forward.1} parent=0 // pred_fallthru
    _

</llo_original>
